<compile_context>
chip_gen: v6e
topology: v6e:2x2x1
jax: 0.10.0
libtpu: 0.0.40
codegen_flags: <defaults>
</compile_context>

<pallas_src>
import functools

import numpy as np
import jax
import jax.numpy as jnp
from jax import lax
from jax.experimental import pallas as pl
from jax.experimental.pallas import tpu as pltpu


# --------------------------------------------------------------------------- #
# Pallas kernel
# --------------------------------------------------------------------------- #
def _block_kernel(x_ref, w1_ref, w2sk_ref, pp_ref, o_ref, a1pad_ref, a2pad_ref,
                  *, N, H, W, Cin, Cp):
    f32, bf16 = jnp.float32, jnp.bfloat16
    eps = 1e-5
    WCin = W * Cin                    # 64 lanes  (raw-input slab width)
    WC = W * Cp                       # 128 lanes (activation / output slab width)
    NH = N * H
    inv_cnt = 1.0 / float(N * H * W)

    x3 = x_ref[...]                   # (N, H, WCin) f32
    x2 = x3.reshape(NH, WCin)         # free reshape (H multiple of 8)

    # ---- bn1: exact-f32 stats; fold+spread via XLU lane-roll tree -----------
    xs = jnp.sum(x2, axis=0, keepdims=True)                 # (1, WCin)
    xq = jnp.sum(x2 * x2, axis=0, keepdims=True)            # (1, WCin)
    st1 = jnp.concatenate([xs, xq], axis=0)                 # (2, WCin)
    st1 = jnp.concatenate([st1, st1], axis=1)               # (2, 2*WCin): 2W groups
    sh = Cin
    while sh < 2 * WCin:              # shifts Cin, 2Cin, ... cover all 2W groups
        st1 = st1 + pltpu.roll(st1, shift=sh, axis=1)
        sh *= 2
    mu1 = st1[0:1, 0:WCin] * (0.5 * inv_cnt)                # duplicated -> halve
    var1 = st1[1:2, 0:WCin] * (0.5 * inv_cnt) - mu1 * mu1
    scale1 = pp_ref[0:1, 0:WCin] * lax.rsqrt(var1 + eps)    # spread g1 row
    shift1 = pp_ref[1:2, 0:WCin] - mu1 * scale1             # spread b1 row
    a1 = jnp.maximum(x3 * scale1.reshape(1, 1, WCin)
                     + shift1.reshape(1, 1, WCin), 0.0)     # (N, H, WCin)

    # ---- conv1 (3x3, pad 1): padded-row scratch + ONE fused MXU matmul ------
    zr1 = jnp.zeros((N, 1, WCin), f32)
    a1pad_ref[:, 0:1, :] = zr1
    a1pad_ref[:, H + 1:H + 2, :] = zr1
    a1pad_ref[:, 1:H + 1, :] = a1
    lhs1 = jnp.concatenate([a1pad_ref[:, 0:H, :],
                            a1pad_ref[:, 1:H + 1, :],
                            a1pad_ref[:, 2:H + 2, :]], axis=-1)   # (N, H, 3*WCin)
    out1 = jnp.dot(lhs1.reshape(NH, 3 * WCin).astype(bf16), w1_ref[...],
                   preferred_element_type=f32)                    # (NH, WC) f32

    # ---- bn2: exact-f32 stats off the MXU (sublane reduce + roll tree) ------
    os_ = jnp.sum(out1, axis=0, keepdims=True)               # (1, WC)
    oq = jnp.sum(out1 * out1, axis=0, keepdims=True)
    st2 = jnp.concatenate([os_, oq], axis=0)                 # (2, WC): W groups
    sh = Cp
    while sh < WC:
        st2 = st2 + pltpu.roll(st2, shift=sh, axis=1)
        sh *= 2
    mu2 = st2[0:1, :] * inv_cnt
    var2 = st2[1:2, :] * inv_cnt - mu2 * mu2
    scale2 = pp_ref[2:3, :] * lax.rsqrt(var2 + eps)          # spread g2 row
    shift2 = pp_ref[3:4, :] - mu2 * scale2                   # spread b2 row
    a2 = jnp.maximum(out1 * scale2 + shift2, 0.0)            # (NH, WC)

    # ---- conv2 (3x3, pad 1) + 1x1 skip fused into ONE MXU matmul ------------
    zr2 = jnp.zeros((N, 1, WC), f32)
    a2pad_ref[:, 0:1, :] = zr2
    a2pad_ref[:, H + 1:H + 2, :] = zr2
    a2pad_ref[:, 1:H + 1, :] = a2.reshape(N, H, WC)
    lhs2 = jnp.concatenate([a2pad_ref[:, 0:H, :],
                            a2pad_ref[:, 1:H + 1, :],
                            a2pad_ref[:, 2:H + 2, :],
                            x3], axis=-1)                    # (N, H, 3*WC + WCin)
    res = jnp.dot(lhs2.reshape(NH, 3 * WC + WCin).astype(bf16), w2sk_ref[...],
                  preferred_element_type=f32)                # (NH, WC) = conv2 + skip

    # lane-dense (N*H, W*Cp) output slab -> unmasked dense store.
    o_ref[...] = (res + pp_ref[4:5, :]).astype(o_ref.dtype)  # + skip bias row


# --------------------------------------------------------------------------- #
# Wrapper
# --------------------------------------------------------------------------- #
def basic_block_discrim(x_nhwc, params):
    """x_nhwc: (N, H, W, Cin) float32 -> (N, H, W, Cp) float32."""
    N, H, W, Cin = x_nhwc.shape
    WC = params["w2sk_cat"].shape[1]
    Cp = WC // W
    WCin = W * Cin
    NH = N * H

    x3 = x_nhwc.astype(jnp.float32).reshape(N, H, WCin)   # free reshape, no pad op

    kernel = functools.partial(_block_kernel, N=N, H=H, W=W, Cin=Cin, Cp=Cp)
    vmem = pl.BlockSpec(memory_space=pltpu.MemorySpace.VMEM)

    flops = 2 * NH * (3 * WCin * WC + (3 * WC + WCin) * WC) + 12 * NH * WC
    bytes_accessed = (4 * (N * H * WCin + 5 * WC + NH * WC)
                      + 2 * (3 * WCin * WC + (3 * WC + WCin) * WC))

    out2d = pl.pallas_call(
        kernel,
        out_shape=jax.ShapeDtypeStruct((NH, WC), jnp.float32),
        in_specs=[vmem] * 4,
        out_specs=vmem,
        scratch_shapes=[pltpu.VMEM((N, H + 2, WCin), jnp.float32),
                        pltpu.VMEM((N, H + 2, WC), jnp.float32)],
        cost_estimate=pl.CostEstimate(flops=int(flops),
                                      transcendentals=WCin + WC,
                                      bytes_accessed=int(bytes_accessed)),
    )(x3, params["w1cat"], params["w2sk_cat"], params["pp"])
    return out2d.reshape(N, H, W, Cp)


# --------------------------------------------------------------------------- #
# One-time parameter preparation (fused block-Toeplitz matrices, packed rows)
# --------------------------------------------------------------------------- #
def prepare_block_params(w1_oihw, w2_oihw, wsk_oihw, bsk, g1, b1, g2, b2, H, W):
    w1 = np.asarray(jax.device_get(w1_oihw), np.float32)     # (Cp, Cin, 3, 3)
    w2 = np.asarray(jax.device_get(w2_oihw), np.float32)     # (Cp, Cp, 3, 3)
    wsk = np.asarray(jax.device_get(wsk_oihw), np.float32)   # (Cp, Cin, 1, 1)
    Cp, Cin = w1.shape[0], w1.shape[1]
    WCin, WC = W * Cin, W * Cp
    assert W & (W - 1) == 0, "roll-tree BN fold needs W to be a power of two"
    assert Cp >= Cin, "packed param slab assumes W*Cp >= W*Cin"

    w1_t = w1.transpose(2, 3, 1, 0)     # (ky, kx, Cin, Cp)
    w2_t = w2.transpose(2, 3, 1, 0)     # (ky, kx, Cp, Cp)
    wsk_t = wsk.reshape(Cp, Cin).T      # (Cin, Cp)

    # conv1: K-fused (over ky) block-Toeplitz on the unpadded-width slab.
    w1cat = np.zeros((3 * WCin, WC), np.float32)
    for dy in range(3):
        for dx in range(3):
            for w in range(W):
                xcol = w + dx - 1
                if 0 <= xcol < W:
                    w1cat[dy * WCin + xcol * Cin: dy * WCin + (xcol + 1) * Cin,
                          w * Cp:(w + 1) * Cp] = w1_t[dy, dx]

    # conv2: K-fused block-Toeplitz, with the 1x1 skip conv appended along K.
    w2sk = np.zeros((3 * WC + WCin, WC), np.float32)
    for dy in range(3):
        for dx in range(3):
            for w in range(W):
                xcol = w + dx - 1
                if 0 <= xcol < W:
                    w2sk[dy * WC + xcol * Cp: dy * WC + (xcol + 1) * Cp,
                         w * Cp:(w + 1) * Cp] = w2_t[dy, dx]
    for w in range(W):
        w2sk[3 * WC + w * Cin: 3 * WC + (w + 1) * Cin,
             w * Cp:(w + 1) * Cp] = wsk_t

    # Packed f32 parameter slab (single DMA): spread g1/b1 (W*Cin lanes) and
    # g2/b2/skip-bias (W*Cp lanes) rows; lane j carries channel j % C.
    pp = np.zeros((5, WC), np.float32)
    pp[0, :WCin] = np.tile(np.asarray(jax.device_get(g1), np.float32), W)
    pp[1, :WCin] = np.tile(np.asarray(jax.device_get(b1), np.float32), W)
    pp[2, :] = np.tile(np.asarray(jax.device_get(g2), np.float32), W)
    pp[3, :] = np.tile(np.asarray(jax.device_get(b2), np.float32), W)
    pp[4, :] = np.tile(np.asarray(jax.device_get(bsk), np.float32), W)

    return dict(
        w1cat=jnp.asarray(w1cat, jnp.bfloat16),      # bf16 weights: half the DMA
        w2sk_cat=jnp.asarray(w2sk, jnp.bfloat16),
        pp=jnp.asarray(pp),
    )


# --------------------------------------------------------------------------- #
# Spectral norm (1 power iteration, classic SpectralNorm wrapper semantics)
# --------------------------------------------------------------------------- #
# TODO(synk): the SpectralNorm power iteration is a host/JAX-side weight
# re-parametrisation (not per-pixel compute); it is applied once before the
# kernel rather than translated into Pallas.
def _l2n(v, eps=1e-12):
    return v / (jnp.linalg.norm(v) + eps)


def spectral_norm(w, key, n_power_iterations=1):
    h = w.shape[0]
    w_mat = w.reshape(h, -1)
    u = _l2n(jax.random.normal(key, (h,), jnp.float32))
    v = None
    for _ in range(n_power_iterations):
        v = _l2n(w_mat.T @ u)
        u = _l2n(w_mat @ v)
    sigma = u @ (w_mat @ v)
    return w / sigma


# Pure-JAX NCHW reference of the PyTorch forward (correctness check only).
def _reference_nchw(x, w1, w2, wsk, bsk, g1, b1, g2, b2, eps=1e-5):
    def bn(t, g, b):
        mu = jnp.mean(t, axis=(0, 2, 3), keepdims=True)
        var = jnp.mean((t - mu) ** 2, axis=(0, 2, 3), keepdims=True)
        return (t - mu) * lax.rsqrt(var + eps) * g.reshape(1, -1, 1, 1) + b.reshape(1, -1, 1, 1)

    def conv(t, w, pad):
        return lax.conv_general_dilated(
            t, w, window_strides=(1, 1), padding=((pad, pad), (pad, pad)),
            dimension_numbers=("NCHW", "OIHW", "NCHW"),
            precision=lax.Precision.HIGHEST)

    out = jax.nn.relu(bn(x, g1, b1))
    out = conv(out, w1, 1)
    out = jax.nn.relu(bn(out, g2, b2))
    out = conv(out, w2, 1)
    resid = conv(x, wsk, 0) + bsk.reshape(1, -1, 1, 1)
    return out + resid


if __name__ == "__main__":
    N, Cin, Cp, H, W = 2, 4, 8, 16, 16           # inplanes=4, planes=8
    key = jax.random.PRNGKey(0)
    ks = jax.random.split(key, 13)

    x_nchw = jax.random.normal(ks[0], (N, Cin, H, W), jnp.float32)

    w1_raw = 0.2 * jax.random.normal(ks[1], (Cp, Cin, 3, 3), jnp.float32)
    w2_raw = 0.2 * jax.random.normal(ks[2], (Cp, Cp, 3, 3), jnp.float32)
    wsk_raw = 0.2 * jax.random.normal(ks[3], (Cp, Cin, 1, 1), jnp.float32)
    bsk = 0.1 * jax.random.normal(ks[4], (Cp,), jnp.float32)
    g1 = 1.0 + 0.1 * jax.random.normal(ks[5], (Cin,), jnp.float32)
    b1 = 0.1 * jax.random.normal(ks[6], (Cin,), jnp.float32)
    g2 = 1.0 + 0.1 * jax.random.normal(ks[7], (Cp,), jnp.float32)
    b2 = 0.1 * jax.random.normal(ks[8], (Cp,), jnp.float32)

    w1_oihw = spectral_norm(w1_raw, ks[9])
    w2_oihw = spectral_norm(w2_raw, ks[10])
    wsk_oihw = spectral_norm(wsk_raw, ks[11])

    params = prepare_block_params(w1_oihw, w2_oihw, wsk_oihw, bsk, g1, b1, g2, b2, H, W)

    x_nhwc = jnp.transpose(x_nchw, (0, 2, 3, 1))
    out_nhwc = jax.block_until_ready(basic_block_discrim(x_nhwc, params))
    out_nchw = jnp.transpose(out_nhwc, (0, 3, 1, 2))

    ref = jax.block_until_ready(
        _reference_nchw(x_nchw, w1_oihw, w2_oihw, wsk_oihw, bsk, g1, b1, g2, b2))

    assert out_nchw.shape == (N, Cp, H, W)
    err = float(jnp.max(jnp.abs(out_nchw - ref)))
    # Tolerance accommodates the bf16 MXU operand rounding (two convs); genuine
    # tap/offset/stat bugs show up as errors O(0.1) or larger.
    assert err < 3e-2, f"max abs err = {err}"
    print("KERNEL_OK")
</pallas_src>

<mosaic_0001>
module attributes {stable_mosaic.version = 11 : i64} {
  func.func @_block_kernel(%arg0: memref<2x16x64xf32, #tpu.memory_space<vmem>>, %arg1: memref<192x128xbf16, #tpu.memory_space<vmem>>, %arg2: memref<448x128xbf16, #tpu.memory_space<vmem>>, %arg3: memref<5x128xf32, #tpu.memory_space<vmem>>, %arg4: memref<32x128xf32, #tpu.memory_space<vmem>>, %arg5: memref<2x18x64xf32, #tpu.memory_space<vmem>>, %arg6: memref<2x18x128xf32, #tpu.memory_space<vmem>>) attributes {dimension_semantics = [], scalar_prefetch = 0 : i64, scratch_operands = 2 : i64, tpu.core_type = #tpu.core_type<tc>} {
    %c0 = arith.constant 0 : index
    %c0_0 = arith.constant 0 : index
    %c0_1 = arith.constant 0 : index
    %0 = vector.load %arg0[%c0, %c0_0, %c0_1] : memref<2x16x64xf32, #tpu.memory_space<vmem>>, vector<2x16x64xf32>
    %1 = vector.shape_cast %0 : vector<2x16x64xf32> to vector<32x64xf32>
    %cst = arith.constant dense<0.000000e+00> : vector<64xf32>
    %2 = vector.multi_reduction <add>, %1, %cst [0] : vector<32x64xf32> to vector<64xf32>
    %3 = vector.shape_cast %2 : vector<64xf32> to vector<1x64xf32>
    %4 = arith.mulf %1, %1 : vector<32x64xf32>
    %cst_2 = arith.constant dense<0.000000e+00> : vector<64xf32>
    %5 = vector.multi_reduction <add>, %4, %cst_2 [0] : vector<32x64xf32> to vector<64xf32>
    %6 = vector.shape_cast %5 : vector<64xf32> to vector<1x64xf32>
    %7 = tpu.concatenate %3, %6 in 0 : vector<1x64xf32>, vector<1x64xf32> -> vector<2x64xf32>
    %8 = tpu.concatenate %7, %7 in 1 : vector<2x64xf32>, vector<2x64xf32> -> vector<2x128xf32>
    %c4_i32 = arith.constant 4 : i32
    %9 = tpu.dynamic_rotate %8 by %c4_i32 dim 1 : vector<2x128xf32>, i32 -> vector<2x128xf32>
    %10 = arith.addf %8, %9 : vector<2x128xf32>
    %c8_i32 = arith.constant 8 : i32
    %11 = tpu.dynamic_rotate %10 by %c8_i32 dim 1 : vector<2x128xf32>, i32 -> vector<2x128xf32>
    %12 = arith.addf %10, %11 : vector<2x128xf32>
    %c16_i32 = arith.constant 16 : i32
    %13 = tpu.dynamic_rotate %12 by %c16_i32 dim 1 : vector<2x128xf32>, i32 -> vector<2x128xf32>
    %14 = arith.addf %12, %13 : vector<2x128xf32>
    %c32_i32 = arith.constant 32 : i32
    %15 = tpu.dynamic_rotate %14 by %c32_i32 dim 1 : vector<2x128xf32>, i32 -> vector<2x128xf32>
    %16 = arith.addf %14, %15 : vector<2x128xf32>
    %c64_i32 = arith.constant 64 : i32
    %17 = tpu.dynamic_rotate %16 by %c64_i32 dim 1 : vector<2x128xf32>, i32 -> vector<2x128xf32>
    %18 = arith.addf %16, %17 : vector<2x128xf32>
    %19 = vector.extract_strided_slice %18 {offsets = [0, 0], sizes = [1, 64], strides = [1, 1]} : vector<2x128xf32> to vector<1x64xf32>
    %cst_3 = arith.constant 9.765625E-4 : f32
    %20 = vector.broadcast %cst_3 : f32 to vector<1x64xf32>
    %21 = arith.mulf %19, %20 : vector<1x64xf32>
    %22 = vector.extract_strided_slice %18 {offsets = [1, 0], sizes = [1, 64], strides = [1, 1]} : vector<2x128xf32> to vector<1x64xf32>
    %cst_4 = arith.constant 9.765625E-4 : f32
    %23 = vector.broadcast %cst_4 : f32 to vector<1x64xf32>
    %24 = arith.mulf %22, %23 : vector<1x64xf32>
    %25 = arith.mulf %21, %21 : vector<1x64xf32>
    %26 = arith.subf %24, %25 : vector<1x64xf32>
    %c0_5 = arith.constant 0 : index
    %c0_6 = arith.constant 0 : index
    %27 = vector.load %arg3[%c0_5, %c0_6] : memref<5x128xf32, #tpu.memory_space<vmem>>, vector<1x64xf32>
    %cst_7 = arith.constant 9.99999974E-6 : f32
    %28 = vector.broadcast %cst_7 : f32 to vector<1x64xf32>
    %29 = arith.addf %26, %28 : vector<1x64xf32>
    %30 = math.rsqrt %29 : vector<1x64xf32>
    %31 = arith.mulf %27, %30 : vector<1x64xf32>
    %c1 = arith.constant 1 : index
    %c0_8 = arith.constant 0 : index
    %32 = vector.load %arg3[%c1, %c0_8] : memref<5x128xf32, #tpu.memory_space<vmem>>, vector<1x64xf32>
    %33 = arith.mulf %21, %31 : vector<1x64xf32>
    %34 = arith.subf %32, %33 : vector<1x64xf32>
    %35 = vector.shape_cast %31 : vector<1x64xf32> to vector<1x1x64xf32>
    %36 = vector.broadcast %35 : vector<1x1x64xf32> to vector<2x16x64xf32>
    %37 = arith.mulf %0, %36 : vector<2x16x64xf32>
    %38 = vector.shape_cast %34 : vector<1x64xf32> to vector<1x1x64xf32>
    %39 = vector.broadcast %38 : vector<1x1x64xf32> to vector<2x16x64xf32>
    %40 = arith.addf %37, %39 : vector<2x16x64xf32>
    %cst_9 = arith.constant 0.000000e+00 : f32
    %41 = vector.broadcast %cst_9 : f32 to vector<2x16x64xf32>
    %42 = arith.maximumf %40, %41 : vector<2x16x64xf32>
    %cst_10 = arith.constant 0.000000e+00 : f32
    %43 = vector.broadcast %cst_10 : f32 to vector<2x1x64xf32>
    %c0_11 = arith.constant 0 : index
    %c0_12 = arith.constant 0 : index
    %c0_13 = arith.constant 0 : index
    %44 = vector.load %arg5[%c0_11, %c0_12, %c0_13] : memref<2x18x64xf32, #tpu.memory_space<vmem>>, vector<2x1x64xf32>
    tpu.vector_store %arg5[%c0_11, %c0_12, %c0_13], %43 {strides = array<i32>} : memref<2x18x64xf32, #tpu.memory_space<vmem>>, vector<2x1x64xf32>,
    %c0_14 = arith.constant 0 : index
    %c17 = arith.constant 17 : index
    %c0_15 = arith.constant 0 : index
    %45 = vector.load %arg5[%c0_14, %c17, %c0_15] : memref<2x18x64xf32, #tpu.memory_space<vmem>>, vector<2x1x64xf32>
    tpu.vector_store %arg5[%c0_14, %c17, %c0_15], %43 {strides = array<i32>} : memref<2x18x64xf32, #tpu.memory_space<vmem>>, vector<2x1x64xf32>,
    %c0_16 = arith.constant 0 : index
    %c1_17 = arith.constant 1 : index
    %c0_18 = arith.constant 0 : index
    %46 = vector.load %arg5[%c0_16, %c1_17, %c0_18] : memref<2x18x64xf32, #tpu.memory_space<vmem>>, vector<2x16x64xf32>
    tpu.vector_store %arg5[%c0_16, %c1_17, %c0_18], %42 {strides = array<i32>} : memref<2x18x64xf32, #tpu.memory_space<vmem>>, vector<2x16x64xf32>,
    %c0_19 = arith.constant 0 : index
    %c0_20 = arith.constant 0 : index
    %c0_21 = arith.constant 0 : index
    %47 = vector.load %arg5[%c0_19, %c0_20, %c0_21] : memref<2x18x64xf32, #tpu.memory_space<vmem>>, vector<2x16x64xf32>
    %c0_22 = arith.constant 0 : index
    %c1_23 = arith.constant 1 : index
    %c0_24 = arith.constant 0 : index
    %48 = vector.load %arg5[%c0_22, %c1_23, %c0_24] : memref<2x18x64xf32, #tpu.memory_space<vmem>>, vector<2x16x64xf32>
    %c0_25 = arith.constant 0 : index
    %c2 = arith.constant 2 : index
    %c0_26 = arith.constant 0 : index
    %49 = vector.load %arg5[%c0_25, %c2, %c0_26] : memref<2x18x64xf32, #tpu.memory_space<vmem>>, vector<2x16x64xf32>
    %50 = tpu.concatenate %47, %48, %49 in 2 : vector<2x16x64xf32>, vector<2x16x64xf32>, vector<2x16x64xf32> -> vector<2x16x192xf32>
    %51 = vector.shape_cast %50 : vector<2x16x192xf32> to vector<32x192xf32>
    %52 = arith.truncf %51 : vector<32x192xf32> to vector<32x192xbf16>
    %c0_27 = arith.constant 0 : index
    %c0_28 = arith.constant 0 : index
    %53 = vector.load %arg1[%c0_27, %c0_28] : memref<192x128xbf16, #tpu.memory_space<vmem>>, vector<192x128xbf16>
    %cst_29 = arith.constant dense<0.000000e+00> : vector<32x128xf32>
    %54 = tpu.matmul %52, %53, %cst_29 {dimension_numbers = #tpu.dot_dimension_numbers<[1], [0], [0], [1], [0, 0, 1, 1], [], []>} : vector<32x192xbf16>, vector<192x128xbf16>, vector<32x128xf32> -> vector<32x128xf32>
    %cst_30 = arith.constant dense<0.000000e+00> : vector<128xf32>
    %55 = vector.multi_reduction <add>, %54, %cst_30 [0] : vector<32x128xf32> to vector<128xf32>
    %56 = vector.shape_cast %55 : vector<128xf32> to vector<1x128xf32>
    %57 = arith.mulf %54, %54 : vector<32x128xf32>
    %cst_31 = arith.constant dense<0.000000e+00> : vector<128xf32>
    %58 = vector.multi_reduction <add>, %57, %cst_31 [0] : vector<32x128xf32> to vector<128xf32>
    %59 = vector.shape_cast %58 : vector<128xf32> to vector<1x128xf32>
    %60 = tpu.concatenate %56, %59 in 0 : vector<1x128xf32>, vector<1x128xf32> -> vector<2x128xf32>
    %c8_i32_32 = arith.constant 8 : i32
    %61 = tpu.dynamic_rotate %60 by %c8_i32_32 dim 1 : vector<2x128xf32>, i32 -> vector<2x128xf32>
    %62 = arith.addf %60, %61 : vector<2x128xf32>
    %c16_i32_33 = arith.constant 16 : i32
    %63 = tpu.dynamic_rotate %62 by %c16_i32_33 dim 1 : vector<2x128xf32>, i32 -> vector<2x128xf32>
    %64 = arith.addf %62, %63 : vector<2x128xf32>
    %c32_i32_34 = arith.constant 32 : i32
    %65 = tpu.dynamic_rotate %64 by %c32_i32_34 dim 1 : vector<2x128xf32>, i32 -> vector<2x128xf32>
    %66 = arith.addf %64, %65 : vector<2x128xf32>
    %c64_i32_35 = arith.constant 64 : i32
    %67 = tpu.dynamic_rotate %66 by %c64_i32_35 dim 1 : vector<2x128xf32>, i32 -> vector<2x128xf32>
    %68 = arith.addf %66, %67 : vector<2x128xf32>
    %69 = vector.extract_strided_slice %68 {offsets = [0, 0], sizes = [1, 128], strides = [1, 1]} : vector<2x128xf32> to vector<1x128xf32>
    %cst_36 = arith.constant 0.001953125 : f32
    %70 = vector.broadcast %cst_36 : f32 to vector<1x128xf32>
    %71 = arith.mulf %69, %70 : vector<1x128xf32>
    %72 = vector.extract_strided_slice %68 {offsets = [1, 0], sizes = [1, 128], strides = [1, 1]} : vector<2x128xf32> to vector<1x128xf32>
    %cst_37 = arith.constant 0.001953125 : f32
    %73 = vector.broadcast %cst_37 : f32 to vector<1x128xf32>
    %74 = arith.mulf %72, %73 : vector<1x128xf32>
    %75 = arith.mulf %71, %71 : vector<1x128xf32>
    %76 = arith.subf %74, %75 : vector<1x128xf32>
    %c2_38 = arith.constant 2 : index
    %c0_39 = arith.constant 0 : index
    %77 = vector.load %arg3[%c2_38, %c0_39] : memref<5x128xf32, #tpu.memory_space<vmem>>, vector<1x128xf32>
    %cst_40 = arith.constant 9.99999974E-6 : f32
    %78 = vector.broadcast %cst_40 : f32 to vector<1x128xf32>
    %79 = arith.addf %76, %78 : vector<1x128xf32>
    %80 = math.rsqrt %79 : vector<1x128xf32>
    %81 = arith.mulf %77, %80 : vector<1x128xf32>
    %c3 = arith.constant 3 : index
    %c0_41 = arith.constant 0 : index
    %82 = vector.load %arg3[%c3, %c0_41] : memref<5x128xf32, #tpu.memory_space<vmem>>, vector<1x128xf32>
    %83 = arith.mulf %71, %81 : vector<1x128xf32>
    %84 = arith.subf %82, %83 : vector<1x128xf32>
    %85 = vector.broadcast %81 : vector<1x128xf32> to vector<32x128xf32>
    %86 = arith.mulf %54, %85 : vector<32x128xf32>
    %87 = vector.broadcast %84 : vector<1x128xf32> to vector<32x128xf32>
    %88 = arith.addf %86, %87 : vector<32x128xf32>
    %cst_42 = arith.constant 0.000000e+00 : f32
    %89 = vector.broadcast %cst_42 : f32 to vector<32x128xf32>
    %90 = arith.maximumf %88, %89 : vector<32x128xf32>
    %cst_43 = arith.constant 0.000000e+00 : f32
    %91 = vector.broadcast %cst_43 : f32 to vector<2x1x128xf32>
    %c0_44 = arith.constant 0 : index
    %c0_45 = arith.constant 0 : index
    %c0_46 = arith.constant 0 : index
    %92 = vector.load %arg6[%c0_44, %c0_45, %c0_46] : memref<2x18x128xf32, #tpu.memory_space<vmem>>, vector<2x1x128xf32>
    tpu.vector_store %arg6[%c0_44, %c0_45, %c0_46], %91 {strides = array<i32>} : memref<2x18x128xf32, #tpu.memory_space<vmem>>, vector<2x1x128xf32>,
    %c0_47 = arith.constant 0 : index
    %c17_48 = arith.constant 17 : index
    %c0_49 = arith.constant 0 : index
    %93 = vector.load %arg6[%c0_47, %c17_48, %c0_49] : memref<2x18x128xf32, #tpu.memory_space<vmem>>, vector<2x1x128xf32>
    tpu.vector_store %arg6[%c0_47, %c17_48, %c0_49], %91 {strides = array<i32>} : memref<2x18x128xf32, #tpu.memory_space<vmem>>, vector<2x1x128xf32>,
    %94 = vector.shape_cast %90 : vector<32x128xf32> to vector<2x16x128xf32>
    %c0_50 = arith.constant 0 : index
    %c1_51 = arith.constant 1 : index
    %c0_52 = arith.constant 0 : index
    %95 = vector.load %arg6[%c0_50, %c1_51, %c0_52] : memref<2x18x128xf32, #tpu.memory_space<vmem>>, vector<2x16x128xf32>
    tpu.vector_store %arg6[%c0_50, %c1_51, %c0_52], %94 {strides = array<i32>} : memref<2x18x128xf32, #tpu.memory_space<vmem>>, vector<2x16x128xf32>,
    %c0_53 = arith.constant 0 : index
    %c0_54 = arith.constant 0 : index
    %c0_55 = arith.constant 0 : index
    %96 = vector.load %arg6[%c0_53, %c0_54, %c0_55] : memref<2x18x128xf32, #tpu.memory_space<vmem>>, vector<2x16x128xf32>
    %c0_56 = arith.constant 0 : index
    %c1_57 = arith.constant 1 : index
    %c0_58 = arith.constant 0 : index
    %97 = vector.load %arg6[%c0_56, %c1_57, %c0_58] : memref<2x18x128xf32, #tpu.memory_space<vmem>>, vector<2x16x128xf32>
    %c0_59 = arith.constant 0 : index
    %c2_60 = arith.constant 2 : index
    %c0_61 = arith.constant 0 : index
    %98 = vector.load %arg6[%c0_59, %c2_60, %c0_61] : memref<2x18x128xf32, #tpu.memory_space<vmem>>, vector<2x16x128xf32>
    %99 = tpu.concatenate %96, %97, %98, %0 in 2 : vector<2x16x128xf32>, vector<2x16x128xf32>, vector<2x16x128xf32>, vector<2x16x64xf32> -> vector<2x16x448xf32>
    %100 = vector.shape_cast %99 : vector<2x16x448xf32> to vector<32x448xf32>
    %101 = arith.truncf %100 : vector<32x448xf32> to vector<32x448xbf16>
    %c0_62 = arith.constant 0 : index
    %c0_63 = arith.constant 0 : index
    %102 = vector.load %arg2[%c0_62, %c0_63] : memref<448x128xbf16, #tpu.memory_space<vmem>>, vector<448x128xbf16>
    %cst_64 = arith.constant dense<0.000000e+00> : vector<32x128xf32>
    %103 = tpu.matmul %101, %102, %cst_64 {dimension_numbers = #tpu.dot_dimension_numbers<[1], [0], [0], [1], [0, 0, 1, 1], [], []>} : vector<32x448xbf16>, vector<448x128xbf16>, vector<32x128xf32> -> vector<32x128xf32>
    %c4 = arith.constant 4 : index
    %c0_65 = arith.constant 0 : index
    %104 = vector.load %arg3[%c4, %c0_65] : memref<5x128xf32, #tpu.memory_space<vmem>>, vector<1x128xf32>
    %105 = vector.broadcast %104 : vector<1x128xf32> to vector<32x128xf32>
    %106 = arith.addf %103, %105 : vector<32x128xf32>
    %c0_66 = arith.constant 0 : index
    %c0_67 = arith.constant 0 : index
    %107 = vector.load %arg4[%c0_66, %c0_67] : memref<32x128xf32, #tpu.memory_space<vmem>>, vector<32x128xf32>
    tpu.vector_store %arg4[%c0_66, %c0_67], %106 {strides = array<i32>} : memref<32x128xf32, #tpu.memory_space<vmem>>, vector<32x128xf32>,
    return
  }
}

</mosaic_0001>

<llo_original>
// kernel: tpu_custom_call.1
$region0: #{tpu_custom_call.1}
  #allocation0 [shape = 'u32[]', space=smem, size = 0x4, offset = 0x4, fixed_abs, tag = 'smem constant byte address 0x4 - core index']
  #allocation1 [shape = 'u32[144,128]{1,0:T(1,128)}', space=vmem, size = 0x12000, scoped, tag = 'internal scratch']
  #allocation2 [shape = 'f32[2,18,64]{2,1,0:T(8,128)}', space=vmem, size = 0x6000, scoped, tag = 'scratch operand']
  #allocation3 [shape = 'f32[2,18,128]{2,1,0:T(8,128)}', space=vmem, size = 0x6000, scoped, tag = 'scratch operand']
  %s0 = inlined_call_operand.hbm [shape: f32[2,16,64], index: 0, kind: input, shape index: {}]
  %s1 = inlined_call_operand.hbm [shape: bf16[192,128], index: 1, kind: input, shape index: {}]
  %s2 = inlined_call_operand.hbm [shape: bf16[448,128], index: 2, kind: input, shape index: {}]
  %s3 = inlined_call_operand.hbm [shape: f32[5,128], index: 3, kind: input, shape index: {}]
  %s4 = inlined_call_operand.hbm [shape: f32[32,128], index: 4, kind: output, shape index: {}]
  %s5 = sld [smem:[#allocation0]]
  $region42: #{tpu_custom_call.1} parent=0
    _
  %s7 = ssub.s32 1, %s5
  %s8 = scalar_select 0, %s7, %s5
  $region1: #{tpu_custom_call.1} parent=0
    #allocation4 [shape = 'u8[16384]{0}', space=vmem, size = 0x4000, scoped, tag = 'input window, operand 0, single buffered']
    #allocation5 [shape = 's32[1]{0}', space=sflag, size = 0x4, scoped, tag = 'scoped memory for tpu_custom_call.1']
    #allocation6 [shape = 's32[1]{0}', space=sflag, size = 0x4, scoped, tag = 'scoped memory for tpu_custom_call.1']
    #allocation7 [shape = 'u8[49152]{0}', space=vmem, size = 0xc000, scoped, tag = 'input window, operand 1, single buffered']
    #allocation8 [shape = 's32[1]{0}', space=sflag, size = 0x4, scoped, tag = 'scoped memory for tpu_custom_call.1']
    #allocation9 [shape = 'u8[114688]{0}', space=vmem, size = 0x1c000, scoped, tag = 'input window, operand 2, single buffered']
    #allocation10 [shape = 'u8[4096]{0}', space=vmem, size = 0x1000, scoped, tag = 'input window, operand 3, single buffered']
    #allocation11 [shape = 's32[1]{0}', space=sflag, size = 0x4, scoped, tag = 'scoped memory for tpu_custom_call.1']
    #allocation12 [shape = 'u8[16384]{0}', space=vmem, size = 0x4000, scoped, tag = 'output window, operand 0, single buffered']
    %9 = vsyncpa [#allocation5], 0
    %10 = vsyncpa [#allocation8], 0
    %11 = vsyncpa [#allocation11], 0
    %12 = vsyncpa [#allocation6], 0
    // Predicated region
    $region2: #{tpu_custom_call.1} parent=1 // pred_check
      _
    $region3: #{tpu_custom_call.1} parent=1 // pred_check_branch
      %14 = sbr.rel (0) target = $region5
    $region4: #{tpu_custom_call.1} parent=1 // pred_region
      %s16 = ssub.s32 512, 512
      %17 = vsyncadd [#allocation5], %s16
      %s18 = sshll.u32 [#allocation4], 4
      %s19 = int_to_ptr.vmem [resolvable:$true] %s18
      %24 = dma.hbm_to_vmem [thread:$0]  %s0, 512, %s19, [#allocation5], 128, 128, 8
    $region5: #{tpu_custom_call.1} parent=1 // pred_fallthru
      _
    // Predicated region
    $region6: #{tpu_custom_call.1} parent=1 // pred_check
      _
    $region7: #{tpu_custom_call.1} parent=1 // pred_check_branch
      %26 = sbr.rel (0) target = $region9
    $region8: #{tpu_custom_call.1} parent=1 // pred_region
      %s28 = ssub.s32 1536, 1536
      %29 = vsyncadd [#allocation8], %s28
      %s30 = sshll.u32 [#allocation7], 4
      %s31 = int_to_ptr.vmem [resolvable:$true] %s30
      %36 = dma.hbm_to_vmem [thread:$0]  %s1, 1536, %s31, [#allocation8], 64, 64, 4
    $region9: #{tpu_custom_call.1} parent=1 // pred_fallthru
      _
    // Predicated region
    $region10: #{tpu_custom_call.1} parent=1 // pred_check
      _
    $region11: #{tpu_custom_call.1} parent=1 // pred_check_branch
      %38 = sbr.rel (0) target = $region13
    $region12: #{tpu_custom_call.1} parent=1 // pred_region
      %s40 = ssub.s32 3584, 3584
      %41 = vsyncadd [#allocation8], %s40
      %s42 = sshll.u32 [#allocation9], 4
      %s43 = int_to_ptr.vmem [resolvable:$true] %s42
      %48 = dma.hbm_to_vmem [thread:$0]  %s2, 3584, %s43, [#allocation8], 64, 64, 4
    $region13: #{tpu_custom_call.1} parent=1 // pred_fallthru
      _
    // Predicated region
    $region14: #{tpu_custom_call.1} parent=1 // pred_check
      _
    $region15: #{tpu_custom_call.1} parent=1 // pred_check_branch
      %50 = sbr.rel (0) target = $region17
    $region16: #{tpu_custom_call.1} parent=1 // pred_region
      %s52 = ssub.s32 128, 128
      %53 = vsyncadd [#allocation11], %s52
      %s55 = sshll.u32 [#allocation10], 4
      %s56 = int_to_ptr.vmem [resolvable:$true] %s55
      %58 = dma.hbm_to_vmem [thread:$0]  %s3, 128, %s56, [#allocation11]
    $region17: #{tpu_custom_call.1} parent=1 // pred_fallthru
      _
    // Predicated region
    $region18: #{tpu_custom_call.1} parent=1 // pred_check
      _
    $region19: #{tpu_custom_call.1} parent=1 // pred_check_branch
      %60 = sbr.rel (0) target = $region21
    $region20: #{tpu_custom_call.1} parent=1 // pred_region
      %61 = dma.done [#allocation5], 512
    $region21: #{tpu_custom_call.1} parent=1 // pred_fallthru
      _
    // Predicated region
    $region22: #{tpu_custom_call.1} parent=1 // pred_check
      _
    $region23: #{tpu_custom_call.1} parent=1 // pred_check_branch
      %63 = sbr.rel (0) target = $region25
    $region24: #{tpu_custom_call.1} parent=1 // pred_region
      %64 = dma.done [#allocation8], 1536
    $region25: #{tpu_custom_call.1} parent=1 // pred_fallthru
      _
    // Predicated region
    $region26: #{tpu_custom_call.1} parent=1 // pred_check
      _
    $region27: #{tpu_custom_call.1} parent=1 // pred_check_branch
      %66 = sbr.rel (0) target = $region29
    $region28: #{tpu_custom_call.1} parent=1 // pred_region
      %67 = dma.done [#allocation8], 3584
    $region29: #{tpu_custom_call.1} parent=1 // pred_fallthru
      _
    // Predicated region
    $region30: #{tpu_custom_call.1} parent=1 // pred_check
      _
    $region31: #{tpu_custom_call.1} parent=1 // pred_check_branch
      %69 = sbr.rel (0) target = $region33
    $region32: #{tpu_custom_call.1} parent=1 // pred_region
      %70 = dma.done [#allocation11], 128
    $region33: #{tpu_custom_call.1} parent=1 // pred_fallthru
      _
    %v72 = vld [vmem:[#allocation4] sm:$0xff]
    %v73 = vld [vmem:[#allocation4 + $0x8] sm:$0xff]
    %v74 = vld [vmem:[#allocation4 + $0x10] sm:$0xff]
    %v75 = vld [vmem:[#allocation4 + $0x18] sm:$0xff]
    %vm76 = vcmask 523264
    %v77 = vsel %vm76, %v72, 0.0
    %v78 = vsel %vm76, %v73, 0.0
    %v79 = vadd.f32 %v77, %v78
    %v80 = vsel %vm76, %v74, 0.0
    %v81 = vadd.f32 %v79, %v80
    %v82 = vsel %vm76, %v75, 0.0
    %v83 = vadd.f32 %v81, %v82
    %v84 = vrot.slane %v83, 4
    %v85 = vadd.f32 %v83, %v84
    %v86 = vrot.slane %v85, 2
    %v87 = vadd.f32 %v85, %v86
    %v88 = vrot.slane %v87, 1
    %v89 = vadd.f32 %v87, %v88
    %v90 = vmul.f32 %v72, %v72
    %v91 = vmul.f32 %v73, %v73
    %v92 = vmul.f32 %v74, %v74
    %v93 = vmul.f32 %v75, %v75
    %v94 = vsel %vm76, %v90, 0.0
    %v95 = vsel %vm76, %v91, 0.0
    %v96 = vadd.f32 %v94, %v95
    %v97 = vsel %vm76, %v92, 0.0
    %v98 = vadd.f32 %v96, %v97
    %v99 = vsel %vm76, %v93, 0.0
    %v100 = vadd.f32 %v98, %v99
    %v101 = vrot.slane %v100, 4
    %v102 = vadd.f32 %v100, %v101
    %v103 = vrot.slane %v102, 2
    %v104 = vadd.f32 %v102, %v103
    %v105 = vrot.slane %v104, 1
    %v106 = vadd.f32 %v104, %v105
    %vm107 = vcmask 1040384
    %v108 = vsel %vm107, %v89, %v106
    %110 = vrot.lane.b32.xlu0 %v108, 64
    %v111 = vpop.permute.xlu0 %110
    %v113 = vsel %vm76, %v108, %v111
    %114 = vrot.lane.b32.xlu0 %v113, 4
    %v115 = vpop.permute.xlu0 %114
    %v116 = vadd.f32 %v113, %v115
    %117 = vrot.lane.b32.xlu0 %v116, 8
    %v118 = vpop.permute.xlu0 %117
    %v119 = vadd.f32 %v116, %v118
    %120 = vrot.lane.b32.xlu0 %v119, 16
    %v121 = vpop.permute.xlu0 %120
    %v122 = vadd.f32 %v119, %v121
    %123 = vrot.lane.b32.xlu0 %v122, 32
    %v124 = vpop.permute.xlu0 %123
    %v125 = vadd.f32 %v122, %v124
    %126 = vrot.lane.b32.xlu0 %v125, 64
    %v127 = vpop.permute.xlu0 %126
    %v128 = vadd.f32 %v125, %v127
    %v129 = vmul.f32 %v128, 0.0009765625
    %v130 = vmul.f32 %v129, %v129
    %v132 = vrot.slane %v130, 7
    %v134 = vsub.f32 %v129, %v132
    %v135 = vld [vmem:[#allocation10] sm:$0x1]
    %v136 = vadd.f32 %v134, 1e-05
    %v137 = vrsqrt.pop %v136
    %v139 = vrot.slane %v137, 1
    %v141 = vmul.f32 %v135, %v139
    %v142 = vld [vmem:[#allocation10 + $0x1] sm:$0x1]
    %v143 = vmul.f32 %v129, %v141
    %v144 = vsub.f32 %v142, %v143
    %v145 = vlaneseq
    %v146 = vshrl.u32 %v145, 7
    %v147 = vsub.s32 0, %v146
    %v148 = vrot.slane %v141, %v147
    %v149 = vmul.f32 %v72, %v148
    %v150 = vmul.f32 %v73, %v148
    %v151 = vmul.f32 %v74, %v148
    %v152 = vmul.f32 %v75, %v148
    %v153 = vlaneseq
    %v154 = vshrl.u32 %v153, 7
    %v155 = vsub.s32 0, %v154
    %v156 = vrot.slane %v144, %v155
    %v157 = vadd.f32 %v149, %v156
    %v158 = vadd.f32 %v150, %v156
    %v159 = vadd.f32 %v151, %v156
    %v160 = vadd.f32 %v152, %v156
    %v161 = vmax.f32 %v157, 0.0
    %v162 = vmax.f32 %v158, 0.0
    %v163 = vmax.f32 %v159, 0.0
    %v164 = vmax.f32 %v160, 0.0
    %vm165 = vcmask 516096
    %166 = vst.msk [vmem:[#allocation2] sm:$0x1] %vm165, 0.0
    %167 = vst.msk [vmem:[#allocation2 + $0x18] sm:$0x1] %vm165, 0.0
    %168 = vst.msk [vmem:[#allocation2 + $0x11] sm:$0x1] %vm165, 0.0
    %169 = vst.msk [vmem:[#allocation2 + $0x29] sm:$0x1] %vm165, 0.0
    %170 = vst.msk [vmem:[#allocation2 + $0x1] sm:$0xff] %vm76, %v161
    %171 = vst.msk [vmem:[#allocation2 + $0x9] sm:$0xff] %vm76, %v162
    %172 = vst.msk [vmem:[#allocation2 + $0x19] sm:$0xff] %vm76, %v163
    %173 = vst.msk [vmem:[#allocation2 + $0x21] sm:$0xff] %vm76, %v164
    %v174 = vld [vmem:[#allocation2] sm:$0xff]
    %v175 = vld [vmem:[#allocation2 + $0x8] sm:$0xff]
    %v176 = vld [vmem:[#allocation2 + $0x18] sm:$0xff]
    %v177 = vld [vmem:[#allocation2 + $0x20] sm:$0xff]
    %v178 = vld [vmem:[#allocation2 + $0x1] sm:$0xff]
    %v179 = vld [vmem:[#allocation2 + $0x9] sm:$0xff]
    %v180 = vld [vmem:[#allocation2 + $0x19] sm:$0xff]
    %v181 = vld [vmem:[#allocation2 + $0x21] sm:$0xff]
    %v182 = vld [vmem:[#allocation2 + $0x2] sm:$0xff]
    %v183 = vld [vmem:[#allocation2 + $0xa] sm:$0xff]
    %v184 = vld [vmem:[#allocation2 + $0x1a] sm:$0xff]
    %v185 = vld [vmem:[#allocation2 + $0x22] sm:$0xff]
    %190 = vrot.lane.b32.xlu0 %v178, 64
    %v191 = vpop.permute.xlu0 %190
    %192 = vrot.lane.b32.xlu0 %v179, 64
    %v193 = vpop.permute.xlu0 %192
    %194 = vrot.lane.b32.xlu0 %v180, 64
    %v195 = vpop.permute.xlu0 %194
    %196 = vrot.lane.b32.xlu0 %v181, 64
    %v197 = vpop.permute.xlu0 %196
    %v202 = vsel %vm76, %v174, %v191
    %v203 = vsel %vm76, %v175, %v193
    %v204 = vsel %vm76, %v176, %v195
    %v205 = vsel %vm76, %v177, %v197
    %v206 = vpack.c.bf16 %v203, %v202
    %v207 = vpack.c.bf16 %v183, %v182
    %v208 = vpack.c.bf16 %v205, %v204
    %v209 = vpack.c.bf16 %v185, %v184
    %v210 = vld [vmem:[#allocation7] sm:$0xf]
    %v211 = vld [vmem:[#allocation7 + $0x4] sm:$0xf]
    %v212 = vld [vmem:[#allocation7 + $0x8] sm:$0xf]
    %v213 = vld [vmem:[#allocation7 + $0xc] sm:$0xf]
    %v214 = vld [vmem:[#allocation7 + $0x10] sm:$0xf]
    %v215 = vld [vmem:[#allocation7 + $0x14] sm:$0xf]
    %v216 = vld [vmem:[#allocation7 + $0x18] sm:$0xf]
    %v217 = vld [vmem:[#allocation7 + $0x1c] sm:$0xf]
    %v218 = vld [vmem:[#allocation7 + $0x20] sm:$0xf]
    %v219 = vld [vmem:[#allocation7 + $0x24] sm:$0xf]
    %v220 = vld [vmem:[#allocation7 + $0x28] sm:$0xf]
    %v221 = vld [vmem:[#allocation7 + $0x2c] sm:$0xf]
    %v222 = vld [vmem:[#allocation7 + $0x30] sm:$0xf]
    %v223 = vld [vmem:[#allocation7 + $0x34] sm:$0xf]
    %v224 = vld [vmem:[#allocation7 + $0x38] sm:$0xf]
    %v225 = vld [vmem:[#allocation7 + $0x3c] sm:$0xf]
    %v226 = vld [vmem:[#allocation7 + $0x40] sm:$0xf]
    %v227 = vld [vmem:[#allocation7 + $0x44] sm:$0xf]
    %v228 = vld [vmem:[#allocation7 + $0x48] sm:$0xf]
    %v229 = vld [vmem:[#allocation7 + $0x4c] sm:$0xf]
    %v230 = vld [vmem:[#allocation7 + $0x50] sm:$0xf]
    %v231 = vld [vmem:[#allocation7 + $0x54] sm:$0xf]
    %v232 = vld [vmem:[#allocation7 + $0x58] sm:$0xf]
    %v233 = vld [vmem:[#allocation7 + $0x5c] sm:$0xf]
    %v258 = vunpack.c.l.b16 %v210
    %v259 = vunpack.c.l.b16 %v211
    %v260 = vunpack.c.l.b16 %v212
    %v261 = vunpack.c.l.b16 %v213
    %v262 = vunpack.c.l.b16 %v214
    %v263 = vunpack.c.l.b16 %v215
    %v264 = vunpack.c.l.b16 %v216
    %v265 = vunpack.c.l.b16 %v217
    %v266 = vunpack.c.l.b16 %v218
    %v267 = vunpack.c.l.b16 %v219
    %v268 = vunpack.c.l.b16 %v220
    %v269 = vunpack.c.l.b16 %v221
    %v270 = vunpack.c.l.b16 %v222
    %v271 = vunpack.c.l.b16 %v223
    %v272 = vunpack.c.l.b16 %v224
    %v273 = vunpack.c.l.b16 %v225
    %v274 = vunpack.c.l.b16 %v226
    %v275 = vunpack.c.l.b16 %v227
    %v276 = vunpack.c.l.b16 %v228
    %v277 = vunpack.c.l.b16 %v229
    %v278 = vunpack.c.l.b16 %v230
    %v279 = vunpack.c.l.b16 %v231
    %v280 = vunpack.c.l.b16 %v232
    %v281 = vunpack.c.l.b16 %v233
    %v282 = vpack.c.b16 %v259, %v258
    %v283 = vpack.c.b16 %v261, %v260
    %v284 = vpack.c.b16 %v263, %v262
    %v285 = vpack.c.b16 %v265, %v264
    %v286 = vpack.c.b16 %v267, %v266
    %v287 = vpack.c.b16 %v269, %v268
    %v288 = vpack.c.b16 %v271, %v270
    %v289 = vpack.c.b16 %v273, %v272
    %v290 = vpack.c.b16 %v275, %v274
    %v291 = vpack.c.b16 %v277, %v276
    %v292 = vpack.c.b16 %v279, %v278
    %v293 = vpack.c.b16 %v281, %v280
    %v307 = vsel %vm76, %v207, 0
    %v310 = vsel %vm76, %v209, 0
    %312 = vmatprep.subr.bf16.mxu0 0
    %313 = vmatpush1.bf16.msra.mxu0 %v289
    %314 = vmatprep.subr.bf16.mxu0 0
    %315 = vmatpush1.bf16.msra.mxu0 %v288
    %316 = vmatprep.subr.bf16.mxu0 0
    %317 = vmatpush1.bf16.msra.mxu0 %v287
    %318 = vmatprep.subr.bf16.mxu0 0
    %319 = vmatpush1.bf16.msra.mxu0 %v286
    %320 = vmatprep.subr.bf16.mxu0 0
    %321 = vmatpush1.bf16.msra.mxu0 %v285
    %322 = vmatprep.subr.bf16.mxu0 0
    %323 = vmatpush1.bf16.msra.mxu0 %v284
    %324 = vmatprep.subr.bf16.mxu0 0
    %325 = vmatpush1.bf16.msra.mxu0 %v283
    %326 = vmatprep.subr.bf16.mxu0 0
    %327 = vmatpush1.bf16.msra.mxu0 %v282
    %328 = vmatprep.subr.bf16.mxu0 0
    %329 = vmatpush2.bf16.msra.mxu0 0
    %330 = vmatprep.subr.bf16.mxu0 0
    %331 = vmatpush2.bf16.msra.mxu0 0
    %332 = vmatprep.subr.bf16.mxu0 0
    %333 = vmatpush2.bf16.msra.mxu0 0
    %334 = vmatprep.subr.bf16.mxu0 0
    %335 = vmatpush2.bf16.msra.mxu0 0
    %336 = vmatprep.subr.bf16.mxu0 0
    %337 = vmatpush2.bf16.msra.mxu0 %v293
    %338 = vmatprep.subr.bf16.mxu0 0
    %339 = vmatpush2.bf16.msra.mxu0 %v292
    %340 = vmatprep.subr.bf16.mxu0 0
    %341 = vmatpush2.bf16.msra.mxu0 %v291
    %342 = vmatprep.subr.bf16.mxu0 0
    %343 = vmatpush2.bf16.msra.mxu0 %v290
    %344 = vmatprep.mubr.bf16.mxu0 %v307
    %345 = vmatmul.mubr.bf16.gmra.mxu0 %v206
    %v346 = vpop.f32.mrf.mxu0
    %v347 = vadd.f32 0.0, %v346
    %v348 = vpop.f32.mrf.mxu0
    %v349 = vpop.f32.mrf.mxu0
    %v350 = vadd.f32 0.0, %v349
    %v351 = vpop.f32.mrf.mxu0
    %352 = vmatprep.mubr.bf16.mxu0 %v310
    %353 = vmatmul.mubr.bf16.gmra.mxu0 %v208
    %v354 = vpop.f32.mrf.mxu0
    %v355 = vadd.f32 0.0, %v354
    %v356 = vpop.f32.mrf.mxu0
    %v357 = vpop.f32.mrf.mxu0
    %v358 = vadd.f32 0.0, %v357
    %v359 = vpop.f32.mrf.mxu0
    %360 = vdwg.mxu0
    %v361 = vadd.f32 %v347, %v350
    %v362 = vadd.f32 %v361, %v355
    %v363 = vadd.f32 %v362, %v358
    %v364 = vrot.slane %v363, 4
    %v365 = vadd.f32 %v363, %v364
    %v366 = vrot.slane %v365, 2
    %v367 = vadd.f32 %v365, %v366
    %v368 = vrot.slane %v367, 1
    %v369 = vadd.f32 %v367, %v368
    %v370 = vmul.f32 %v347, %v347
    %v371 = vmul.f32 %v350, %v350
    %v372 = vmul.f32 %v355, %v355
    %v373 = vmul.f32 %v358, %v358
    %v374 = vadd.f32 %v370, %v371
    %v375 = vadd.f32 %v374, %v372
    %v376 = vadd.f32 %v375, %v373
    %v377 = vrot.slane %v376, 4
    %v378 = vadd.f32 %v376, %v377
    %v379 = vrot.slane %v378, 2
    %v380 = vadd.f32 %v378, %v379
    %v381 = vrot.slane %v380, 1
    %v382 = vadd.f32 %v380, %v381
    %v383 = vsel %vm107, %v369, %v382
    %384 = vrot.lane.b32.xlu0 %v383, 8
    %v385 = vpop.permute.xlu0 %384
    %v386 = vadd.f32 %v383, %v385
    %387 = vrot.lane.b32.xlu0 %v386, 16
    %v388 = vpop.permute.xlu0 %387
    %v389 = vadd.f32 %v386, %v388
    %390 = vrot.lane.b32.xlu0 %v389, 32
    %v391 = vpop.permute.xlu0 %390
    %v392 = vadd.f32 %v389, %v391
    %393 = vrot.lane.b32.xlu0 %v392, 64
    %v394 = vpop.permute.xlu0 %393
    %v395 = vadd.f32 %v392, %v394
    %v396 = vmul.f32 %v395, 0.001953125
    %v397 = vmul.f32 %v396, %v396
    %v399 = vrot.slane %v397, 7
    %v401 = vsub.f32 %v396, %v399
    %v402 = vld [vmem:[#allocation10 + $0x2] sm:$0x1]
    %v403 = vadd.f32 %v401, 1e-05
    %v404 = vrsqrt.pop %v403
    %v406 = vrot.slane %v404, 1
    %v408 = vmul.f32 %v402, %v406
    %v409 = vld [vmem:[#allocation10 + $0x3] sm:$0x1]
    %v410 = vmul.f32 %v396, %v408
    %v411 = vsub.f32 %v409, %v410
    %v412 = vlaneseq
    %v413 = vshrl.u32 %v412, 7
    %v414 = vsub.s32 0, %v413
    %v415 = vrot.slane %v408, %v414
    %v416 = vmul.f32 %v347, %v415
    %v417 = vmul.f32 %v350, %v415
    %v418 = vmul.f32 %v355, %v415
    %v419 = vmul.f32 %v358, %v415
    %v420 = vlaneseq
    %v421 = vshrl.u32 %v420, 7
    %v422 = vsub.s32 0, %v421
    %v423 = vrot.slane %v411, %v422
    %v424 = vadd.f32 %v416, %v423
    %v425 = vadd.f32 %v417, %v423
    %v426 = vadd.f32 %v418, %v423
    %v427 = vadd.f32 %v419, %v423
    %v428 = vmax.f32 %v424, 0.0
    %v429 = vmax.f32 %v425, 0.0
    %v430 = vmax.f32 %v426, 0.0
    %v431 = vmax.f32 %v427, 0.0
    %432 = vst [vmem:[#allocation3] sm:$0x1] 0.0
    %433 = vst [vmem:[#allocation3 + $0x18] sm:$0x1] 0.0
    %434 = vst [vmem:[#allocation3 + $0x11] sm:$0x1] 0.0
    %435 = vst [vmem:[#allocation3 + $0x29] sm:$0x1] 0.0
    %436 = vst [vmem:[#allocation3 + $0x1] sm:$0xff] %v428
    %437 = vst [vmem:[#allocation3 + $0x9] sm:$0xff] %v429
    %438 = vst [vmem:[#allocation3 + $0x19] sm:$0xff] %v430
    %439 = vst [vmem:[#allocation3 + $0x21] sm:$0xff] %v431
    %v440 = vld [vmem:[#allocation3] sm:$0xff]
    %v441 = vld [vmem:[#allocation3 + $0x8] sm:$0xff]
    %v442 = vld [vmem:[#allocation3 + $0x18] sm:$0xff]
    %v443 = vld [vmem:[#allocation3 + $0x20] sm:$0xff]
    %v444 = vld [vmem:[#allocation3 + $0x1] sm:$0xff]
    %v445 = vld [vmem:[#allocation3 + $0x9] sm:$0xff]
    %v446 = vld [vmem:[#allocation3 + $0x19] sm:$0xff]
    %v447 = vld [vmem:[#allocation3 + $0x21] sm:$0xff]
    %v448 = vld [vmem:[#allocation3 + $0x2] sm:$0xff]
    %v449 = vld [vmem:[#allocation3 + $0xa] sm:$0xff]
    %v450 = vld [vmem:[#allocation3 + $0x1a] sm:$0xff]
    %v451 = vld [vmem:[#allocation3 + $0x22] sm:$0xff]
    %v452 = vpack.c.bf16 %v441, %v440
    %v453 = vpack.c.bf16 %v445, %v444
    %v454 = vpack.c.bf16 %v449, %v448
    %v455 = vpack.c.bf16 %v73, %v72
    %v456 = vpack.c.bf16 %v443, %v442
    %v457 = vpack.c.bf16 %v447, %v446
    %v458 = vpack.c.bf16 %v451, %v450
    %v459 = vpack.c.bf16 %v75, %v74
    %v460 = vld [vmem:[#allocation9] sm:$0xf]
    %v461 = vld [vmem:[#allocation9 + $0x4] sm:$0xf]
    %v462 = vld [vmem:[#allocation9 + $0x8] sm:$0xf]
    %v463 = vld [vmem:[#allocation9 + $0xc] sm:$0xf]
    %v464 = vld [vmem:[#allocation9 + $0x10] sm:$0xf]
    %v465 = vld [vmem:[#allocation9 + $0x14] sm:$0xf]
    %v466 = vld [vmem:[#allocation9 + $0x18] sm:$0xf]
    %v467 = vld [vmem:[#allocation9 + $0x1c] sm:$0xf]
    %v468 = vld [vmem:[#allocation9 + $0x20] sm:$0xf]
    %v469 = vld [vmem:[#allocation9 + $0x24] sm:$0xf]
    %v470 = vld [vmem:[#allocation9 + $0x28] sm:$0xf]
    %v471 = vld [vmem:[#allocation9 + $0x2c] sm:$0xf]
    %v472 = vld [vmem:[#allocation9 + $0x30] sm:$0xf]
    %v473 = vld [vmem:[#allocation9 + $0x34] sm:$0xf]
    %v474 = vld [vmem:[#allocation9 + $0x38] sm:$0xf]
    %v475 = vld [vmem:[#allocation9 + $0x3c] sm:$0xf]
    %v476 = vld [vmem:[#allocation9 + $0x40] sm:$0xf]
    %v477 = vld [vmem:[#allocation9 + $0x44] sm:$0xf]
    %v478 = vld [vmem:[#allocation9 + $0x48] sm:$0xf]
    %v479 = vld [vmem:[#allocation9 + $0x4c] sm:$0xf]
    %v480 = vld [vmem:[#allocation9 + $0x50] sm:$0xf]
    %v481 = vld [vmem:[#allocation9 + $0x54] sm:$0xf]
    %v482 = vld [vmem:[#allocation9 + $0x58] sm:$0xf]
    %v483 = vld [vmem:[#allocation9 + $0x5c] sm:$0xf]
    %v484 = vld [vmem:[#allocation9 + $0x60] sm:$0xf]
    %v485 = vld [vmem:[#allocation9 + $0x64] sm:$0xf]
    %v486 = vld [vmem:[#allocation9 + $0x68] sm:$0xf]
    %v487 = vld [vmem:[#allocation9 + $0x6c] sm:$0xf]
    %v488 = vld [vmem:[#allocation9 + $0x70] sm:$0xf]
    %v489 = vld [vmem:[#allocation9 + $0x74] sm:$0xf]
    %v490 = vld [vmem:[#allocation9 + $0x78] sm:$0xf]
    %v491 = vld [vmem:[#allocation9 + $0x7c] sm:$0xf]
    %v492 = vld [vmem:[#allocation9 + $0x80] sm:$0xf]
    %v493 = vld [vmem:[#allocation9 + $0x84] sm:$0xf]
    %v494 = vld [vmem:[#allocation9 + $0x88] sm:$0xf]
    %v495 = vld [vmem:[#allocation9 + $0x8c] sm:$0xf]
    %v496 = vld [vmem:[#allocation9 + $0x90] sm:$0xf]
    %v497 = vld [vmem:[#allocation9 + $0x94] sm:$0xf]
    %v498 = vld [vmem:[#allocation9 + $0x98] sm:$0xf]
    %v499 = vld [vmem:[#allocation9 + $0x9c] sm:$0xf]
    %v500 = vld [vmem:[#allocation9 + $0xa0] sm:$0xf]
    %v501 = vld [vmem:[#allocation9 + $0xa4] sm:$0xf]
    %v502 = vld [vmem:[#allocation9 + $0xa8] sm:$0xf]
    %v503 = vld [vmem:[#allocation9 + $0xac] sm:$0xf]
    %v504 = vld [vmem:[#allocation9 + $0xb0] sm:$0xf]
    %v505 = vld [vmem:[#allocation9 + $0xb4] sm:$0xf]
    %v506 = vld [vmem:[#allocation9 + $0xb8] sm:$0xf]
    %v507 = vld [vmem:[#allocation9 + $0xbc] sm:$0xf]
    %v508 = vld [vmem:[#allocation9 + $0xc0] sm:$0xf]
    %v509 = vld [vmem:[#allocation9 + $0xc4] sm:$0xf]
    %v510 = vld [vmem:[#allocation9 + $0xc8] sm:$0xf]
    %v511 = vld [vmem:[#allocation9 + $0xcc] sm:$0xf]
    %v512 = vld [vmem:[#allocation9 + $0xd0] sm:$0xf]
    %v513 = vld [vmem:[#allocation9 + $0xd4] sm:$0xf]
    %v514 = vld [vmem:[#allocation9 + $0xd8] sm:$0xf]
    %v515 = vld [vmem:[#allocation9 + $0xdc] sm:$0xf]
    %v516 = vld [vmem:[#allocation10 + $0x4] sm:$0x1]
    %v517 = vlaneseq
    %v518 = vshrl.u32 %v517, 7
    %v519 = vsub.s32 0, %v518
    %v520 = vrot.slane %v516, %v519
    %v577 = vunpack.c.l.b16 %v460
    %v578 = vunpack.c.l.b16 %v461
    %v579 = vunpack.c.l.b16 %v462
    %v580 = vunpack.c.l.b16 %v463
    %v581 = vunpack.c.l.b16 %v464
    %v582 = vunpack.c.l.b16 %v465
    %v583 = vunpack.c.l.b16 %v466
    %v584 = vunpack.c.l.b16 %v467
    %v585 = vunpack.c.l.b16 %v468
    %v586 = vunpack.c.l.b16 %v469
    %v587 = vunpack.c.l.b16 %v470
    %v588 = vunpack.c.l.b16 %v471
    %v589 = vunpack.c.l.b16 %v472
    %v590 = vunpack.c.l.b16 %v473
    %v591 = vunpack.c.l.b16 %v474
    %v592 = vunpack.c.l.b16 %v475
    %v593 = vunpack.c.l.b16 %v476
    %v594 = vunpack.c.l.b16 %v477
    %v595 = vunpack.c.l.b16 %v478
    %v596 = vunpack.c.l.b16 %v479
    %v597 = vunpack.c.l.b16 %v480
    %v598 = vunpack.c.l.b16 %v481
    %v599 = vunpack.c.l.b16 %v482
    %v600 = vunpack.c.l.b16 %v483
    %v601 = vunpack.c.l.b16 %v484
    %v602 = vunpack.c.l.b16 %v485
    %v603 = vunpack.c.l.b16 %v486
    %v604 = vunpack.c.l.b16 %v487
    %v605 = vunpack.c.l.b16 %v488
    %v606 = vunpack.c.l.b16 %v489
    %v607 = vunpack.c.l.b16 %v490
    %v608 = vunpack.c.l.b16 %v491
    %v609 = vunpack.c.l.b16 %v492
    %v610 = vunpack.c.l.b16 %v493
    %v611 = vunpack.c.l.b16 %v494
    %v612 = vunpack.c.l.b16 %v495
    %v613 = vunpack.c.l.b16 %v496
    %v614 = vunpack.c.l.b16 %v497
    %v615 = vunpack.c.l.b16 %v498
    %v616 = vunpack.c.l.b16 %v499
    %v617 = vunpack.c.l.b16 %v500
    %v618 = vunpack.c.l.b16 %v501
    %v619 = vunpack.c.l.b16 %v502
    %v620 = vunpack.c.l.b16 %v503
    %v621 = vunpack.c.l.b16 %v504
    %v622 = vunpack.c.l.b16 %v505
    %v623 = vunpack.c.l.b16 %v506
    %v624 = vunpack.c.l.b16 %v507
    %v625 = vunpack.c.l.b16 %v508
    %v626 = vunpack.c.l.b16 %v509
    %v627 = vunpack.c.l.b16 %v510
    %v628 = vunpack.c.l.b16 %v511
    %v629 = vunpack.c.l.b16 %v512
    %v630 = vunpack.c.l.b16 %v513
    %v631 = vunpack.c.l.b16 %v514
    %v632 = vunpack.c.l.b16 %v515
    %v633 = vpack.c.b16 %v578, %v577
    %v634 = vpack.c.b16 %v580, %v579
    %v635 = vpack.c.b16 %v582, %v581
    %v636 = vpack.c.b16 %v584, %v583
    %v637 = vpack.c.b16 %v586, %v585
    %v638 = vpack.c.b16 %v588, %v587
    %v639 = vpack.c.b16 %v590, %v589
    %v640 = vpack.c.b16 %v592, %v591
    %v641 = vpack.c.b16 %v594, %v593
    %v642 = vpack.c.b16 %v596, %v595
    %v643 = vpack.c.b16 %v598, %v597
    %v644 = vpack.c.b16 %v600, %v599
    %v645 = vpack.c.b16 %v602, %v601
    %v646 = vpack.c.b16 %v604, %v603
    %v647 = vpack.c.b16 %v606, %v605
    %v648 = vpack.c.b16 %v608, %v607
    %v649 = vpack.c.b16 %v610, %v609
    %v650 = vpack.c.b16 %v612, %v611
    %v651 = vpack.c.b16 %v614, %v613
    %v652 = vpack.c.b16 %v616, %v615
    %v653 = vpack.c.b16 %v618, %v617
    %v654 = vpack.c.b16 %v620, %v619
    %v655 = vpack.c.b16 %v622, %v621
    %v656 = vpack.c.b16 %v624, %v623
    %v657 = vpack.c.b16 %v626, %v625
    %v658 = vpack.c.b16 %v628, %v627
    %v659 = vpack.c.b16 %v630, %v629
    %v660 = vpack.c.b16 %v632, %v631
    %v690 = vsel %vm76, %v455, 0
    %v693 = vsel %vm76, %v459, 0
    %695 = vmatprep.subr.bf16.mxu0 0
    %696 = vmatpush1.bf16.msra.mxu0 %v640
    %697 = vmatprep.subr.bf16.mxu0 0
    %698 = vmatpush1.bf16.msra.mxu0 %v639
    %699 = vmatprep.subr.bf16.mxu0 0
    %700 = vmatpush1.bf16.msra.mxu0 %v638
    %701 = vmatprep.subr.bf16.mxu0 0
    %702 = vmatpush1.bf16.msra.mxu0 %v637
    %703 = vmatprep.subr.bf16.mxu0 0
    %704 = vmatpush1.bf16.msra.mxu0 %v636
    %705 = vmatprep.subr.bf16.mxu0 0
    %706 = vmatpush1.bf16.msra.mxu0 %v635
    %707 = vmatprep.subr.bf16.mxu0 0
    %708 = vmatpush1.bf16.msra.mxu0 %v634
    %709 = vmatprep.subr.bf16.mxu0 0
    %710 = vmatpush1.bf16.msra.mxu0 %v633
    %711 = vmatprep.subr.bf16.mxu0 0
    %712 = vmatpush2.bf16.msra.mxu0 %v648
    %713 = vmatprep.subr.bf16.mxu0 0
    %714 = vmatpush2.bf16.msra.mxu0 %v647
    %715 = vmatprep.subr.bf16.mxu0 0
    %716 = vmatpush2.bf16.msra.mxu0 %v646
    %717 = vmatprep.subr.bf16.mxu0 0
    %718 = vmatpush2.bf16.msra.mxu0 %v645
    %719 = vmatprep.subr.bf16.mxu0 0
    %720 = vmatpush2.bf16.msra.mxu0 %v644
    %721 = vmatprep.subr.bf16.mxu0 0
    %722 = vmatpush2.bf16.msra.mxu0 %v643
    %723 = vmatprep.subr.bf16.mxu0 0
    %724 = vmatpush2.bf16.msra.mxu0 %v642
    %725 = vmatprep.subr.bf16.mxu0 0
    %726 = vmatpush2.bf16.msra.mxu0 %v641
    %727 = vmatprep.mubr.bf16.mxu0 %v453
    %728 = vmatmul.mubr.bf16.gmra.mxu0 %v452
    %v729 = vpop.f32.mrf.mxu0
    %v730 = vadd.f32 %v520, %v729
    %v731 = vpop.f32.mrf.mxu0
    %v732 = vpop.f32.mrf.mxu0
    %v733 = vadd.f32 %v520, %v732
    %v734 = vpop.f32.mrf.mxu0
    %735 = vmatprep.mubr.bf16.mxu0 %v457
    %736 = vmatmul.mubr.bf16.gmra.mxu0 %v456
    %v737 = vpop.f32.mrf.mxu0
    %v738 = vadd.f32 %v520, %v737
    %v739 = vpop.f32.mrf.mxu0
    %v740 = vpop.f32.mrf.mxu0
    %v741 = vadd.f32 %v520, %v740
    %v742 = vpop.f32.mrf.mxu0
    %743 = vdwg.mxu0
    %744 = vmatprep.subr.bf16.mxu0 0
    %745 = vmatpush1.bf16.msra.mxu0 %v656
    %746 = vmatprep.subr.bf16.mxu0 0
    %747 = vmatpush1.bf16.msra.mxu0 %v655
    %748 = vmatprep.subr.bf16.mxu0 0
    %749 = vmatpush1.bf16.msra.mxu0 %v654
    %750 = vmatprep.subr.bf16.mxu0 0
    %751 = vmatpush1.bf16.msra.mxu0 %v653
    %752 = vmatprep.subr.bf16.mxu0 0
    %753 = vmatpush1.bf16.msra.mxu0 %v652
    %754 = vmatprep.subr.bf16.mxu0 0
    %755 = vmatpush1.bf16.msra.mxu0 %v651
    %756 = vmatprep.subr.bf16.mxu0 0
    %757 = vmatpush1.bf16.msra.mxu0 %v650
    %758 = vmatprep.subr.bf16.mxu0 0
    %759 = vmatpush1.bf16.msra.mxu0 %v649
    %760 = vmatprep.subr.bf16.mxu0 0
    %761 = vmatpush2.bf16.msra.mxu0 0
    %762 = vmatprep.subr.bf16.mxu0 0
    %763 = vmatpush2.bf16.msra.mxu0 0
    %764 = vmatprep.subr.bf16.mxu0 0
    %765 = vmatpush2.bf16.msra.mxu0 0
    %766 = vmatprep.subr.bf16.mxu0 0
    %767 = vmatpush2.bf16.msra.mxu0 0
    %768 = vmatprep.subr.bf16.mxu0 0
    %769 = vmatpush2.bf16.msra.mxu0 %v660
    %770 = vmatprep.subr.bf16.mxu0 0
    %771 = vmatpush2.bf16.msra.mxu0 %v659
    %772 = vmatprep.subr.bf16.mxu0 0
    %773 = vmatpush2.bf16.msra.mxu0 %v658
    %774 = vmatprep.subr.bf16.mxu0 0
    %775 = vmatpush2.bf16.msra.mxu0 %v657
    %776 = vmatprep.mubr.bf16.mxu0 %v690
    %777 = vmatmul.mubr.bf16.gmra.mxu0 %v454
    %v778 = vpop.f32.mrf.mxu0
    %v779 = vadd.f32 %v730, %v778
    %v780 = vpop.f32.mrf.mxu0
    %v781 = vpop.f32.mrf.mxu0
    %v782 = vadd.f32 %v733, %v781
    %v783 = vpop.f32.mrf.mxu0
    %784 = vmatprep.mubr.bf16.mxu0 %v693
    %785 = vmatmul.mubr.bf16.gmra.mxu0 %v458
    %v786 = vpop.f32.mrf.mxu0
    %v787 = vadd.f32 %v738, %v786
    %v788 = vpop.f32.mrf.mxu0
    %v789 = vpop.f32.mrf.mxu0
    %v790 = vadd.f32 %v741, %v789
    %v791 = vpop.f32.mrf.mxu0
    %792 = vdwg.mxu0
    %793 = vst [vmem:[#allocation12] sm:$0xff] %v779
    %794 = vst [vmem:[#allocation12 + $0x8] sm:$0xff] %v782
    %795 = vst [vmem:[#allocation12 + $0x10] sm:$0xff] %v787
    %796 = vst [vmem:[#allocation12 + $0x18] sm:$0xff] %v790
    // Predicated region
    $region34: #{tpu_custom_call.1} parent=1 // pred_check
      _
    $region35: #{tpu_custom_call.1} parent=1 // pred_check_branch
      %798 = sbr.rel (0) target = $region37
    $region36: #{tpu_custom_call.1} parent=1 // pred_region
      %s800 = ssub.s32 512, 512
      %801 = vsyncadd [#allocation6], %s800
      %s802 = sshll.u32 [#allocation12], 4
      %s803 = int_to_ptr.vmem [resolvable:$true] %s802
      %808 = dma.vmem_to_hbm [thread:$0]  %s803, 512, %s4, [#allocation6], 128, 128, 8
    $region37: #{tpu_custom_call.1} parent=1 // pred_fallthru
      _
    // Predicated region
    $region38: #{tpu_custom_call.1} parent=1 // pred_check
      _
    $region39: #{tpu_custom_call.1} parent=1 // pred_check_branch
      %810 = sbr.rel (0) target = $region41
    $region40: #{tpu_custom_call.1} parent=1 // pred_region
      %811 = dma.done [#allocation6], 512
    $region41: #{tpu_custom_call.1} parent=1 // pred_fallthru
      _
    %812 = vsyncpa [#allocation5], 1
    %813 = vsyncpa [#allocation8], 1
    %814 = vsyncpa [#allocation11], 1
    %815 = vsyncpa [#allocation6], 1

</llo_original>
